<compile_context>
chip_gen: v7x
topology: tpu7x:2x2x1
jax: 0.10.0
libtpu: 0.0.40
codegen_flags: <defaults>
</compile_context>

<pallas_src>
import math

import jax
import jax.numpy as jnp
from jax.experimental import pallas as pl
from jax.experimental.pallas import tpu as pltpu


# --------------------------------------------------------------------------------------
# Kernel: x block (bt, Lb), table blocks (1, Lb), Lb = seq_tile * hidden (lane-dense).
# --------------------------------------------------------------------------------------
def _rope_kernel(x_ref, c_ref, sl_ref, sr_ref, o_ref):
    x = x_ref[...]
    c = c_ref[...]
    if x.dtype != c.dtype:
        x = x.astype(c.dtype)
    # Static-shift rolls (lane slice + concat); cheap XLU/relayout work in a mem-bound kernel.
    left = jnp.roll(x, -1, axis=1)    # left[j]  = x[j+1]
    right = jnp.roll(x, 1, axis=1)    # right[j] = x[j-1]
    out = x * c + left * sl_ref[...] + right * sr_ref[...]
    o_ref[...] = out.astype(o_ref.dtype)


# --------------------------------------------------------------------------------------
# RoPE tables (traced jnp, flattened to (1, S*H)); sign/parity folded into S_L / S_R.
#   C[:, 2k] = C[:, 2k+1] = cos_p[k];  S_L[:, 2k] = -sin_p[k];  S_R[:, 2k+1] = +sin_p[k]
#   pass-through lanes: C = 1, S_L = S_R = 0  (also guarantees roll wrap-around is harmless)
# --------------------------------------------------------------------------------------
def _build_tables(dim, seq_len, hidden, base, table_dtype):
    inv_freq = 1.0 / (base ** (jnp.arange(0, dim, 2, dtype=jnp.float32) / dim))
    t = jnp.arange(seq_len, dtype=jnp.float32)
    freqs = t[:, None] * inv_freq[None, :]                       # (S, dim/2)
    emb = jnp.concatenate([freqs, freqs], axis=-1)               # (S, dim)
    cos_p = jnp.cos(emb[:, 0::2])                                # (S, dim/2) — exact torch slicing
    sin_p = jnp.sin(emb[:, 0::2])
    zeros = jnp.zeros_like(sin_p)

    C = jnp.repeat(cos_p, 2, axis=-1)                                       # (S, dim)
    SL = jnp.stack([-sin_p, zeros], axis=-1).reshape(seq_len, dim)          # -sin on even lanes
    SR = jnp.stack([zeros, sin_p], axis=-1).reshape(seq_len, dim)           # +sin on odd lanes

    if hidden > dim:
        pad1 = jnp.ones((seq_len, hidden - dim), jnp.float32)
        pad0 = jnp.zeros((seq_len, hidden - dim), jnp.float32)
        C = jnp.concatenate([C, pad1], axis=-1)
        SL = jnp.concatenate([SL, pad0], axis=-1)
        SR = jnp.concatenate([SR, pad0], axis=-1)

    flat = lambda a: a.reshape(1, seq_len * hidden).astype(table_dtype)
    return flat(C), flat(SL), flat(SR)


# --------------------------------------------------------------------------------------
# Tile picker: flattened lane width ts*H must be a multiple of 128 (or the full S*H);
# batch tile must be a multiple of 8 (or the full B3).  cdiv grids handle ragged tails.
# --------------------------------------------------------------------------------------
def _pick_tiles(B3, S, H, itemsize, target_bytes=2 * 1024 * 1024):
    g = 128 // math.gcd(H, 128)                       # seq-tile granularity
    bt0 = B3 if B3 <= 8 else 8
    max_ts = max(1, target_bytes // max(1, bt0 * H * itemsize))
    if S <= g or max_ts >= S:
        ts = S                                        # single full-extent seq block
    else:
        ts = max(g, min((S // g) * g, (max_ts // g) * g))
    bt = bt0
    if B3 > 8:                                        # grow batch tile (multiples of 8) if room
        want = max(8, (target_bytes // max(1, ts * H * itemsize)) // 8 * 8)
        bt = min(want, (B3 // 8) * 8)
    return bt, ts


# --------------------------------------------------------------------------------------
# Wrapper
# --------------------------------------------------------------------------------------
def rotary_embedding(x, dim, base=10000, seq_dim=1, donate=False):
    orig_shape = x.shape
    if x.ndim == 3 and seq_dim == 1:
        x3 = x
    elif x.ndim == 4 and seq_dim == 2:
        B, NH, S_, H_ = x.shape
        x3 = x.reshape(B * NH, S_, H_)
    else:
        raise ValueError(f"Unsupported input ndim {x.ndim} or seq_dim {seq_dim}")

    B3, S, H = x3.shape
    if dim % 2 != 0:
        raise ValueError("rotary dim must be even (interleaved pairs)")
    if not (0 < dim <= H):
        raise ValueError("rotary dim must satisfy 0 < dim <= hidden")

    # bf16 inputs: keep compute/tables in bf16 (v6e/v7x native); otherwise f32.
    table_dtype = jnp.bfloat16 if x3.dtype == jnp.bfloat16 else jnp.float32
    C, SL, SR = _build_tables(dim, S, H, base, table_dtype)

    L = S * H
    x2 = x3.reshape(B3, L)                                  # free view; lane-dense for small H
    itemsize = x2.dtype.itemsize

    bt, ts = _pick_tiles(B3, S, H, itemsize)
    Lb = ts * H
    n_seq = pl.cdiv(S, ts)
    n_bat = pl.cdiv(B3, bt)

    # VMEM budget: in/out double-buffered + 3 double-buffered table tiles + compute temps.
    tab_item = jnp.dtype(table_dtype).itemsize
    est = (4 * bt * Lb * itemsize) + (6 * Lb * tab_item) + (5 * bt * Lb * tab_item)
    vmem_limit = int(min(48 * 1024 * 1024, max(16 * 1024 * 1024, est * 1.3)))

    extra = {"input_output_aliases": {0: 0}} if donate else {}
    flat_out = pl.pallas_call(
        _rope_kernel,
        out_shape=jax.ShapeDtypeStruct((B3, L), x2.dtype),
        # seq OUTER, batch INNER -> table block index constant across inner steps (no re-DMA).
        grid=(n_seq, n_bat),
        in_specs=[
            pl.BlockSpec((bt, Lb), lambda s, b: (b, s)),
            pl.BlockSpec((1, Lb), lambda s, b: (0, s)),
            pl.BlockSpec((1, Lb), lambda s, b: (0, s)),
            pl.BlockSpec((1, Lb), lambda s, b: (0, s)),
        ],
        out_specs=pl.BlockSpec((bt, Lb), lambda s, b: (b, s)),
        compiler_params=pltpu.CompilerParams(
            dimension_semantics=("parallel", "parallel"),
            vmem_limit_bytes=vmem_limit,
        ),
        **extra,
    )(x2, C, SL, SR)

    return flat_out.reshape(orig_shape)


# --------------------------------------------------------------------------------------
# Pure-JAX reference replicating the torch forward exactly (strided interleave).
# --------------------------------------------------------------------------------------
def rope_reference(x, dim, base=10000):
    seq_len = x.shape[1]
    inv_freq = 1.0 / (base ** (jnp.arange(0, dim, 2, dtype=jnp.float32) / dim))
    t = jnp.arange(seq_len, dtype=jnp.float32)
    freqs = t[:, None] * inv_freq[None, :]
    emb = jnp.concatenate([freqs, freqs], axis=-1)
    cos = jnp.cos(emb)[None, :, :]
    sin = jnp.sin(emb)[None, :, :]
    x_rope = x[..., :dim]
    x_pass = x[..., dim:]
    x1 = x_rope[..., 0::2]
    x2 = x_rope[..., 1::2]
    cp = cos[..., 0::2]
    sp = sin[..., 0::2]
    r1 = x1 * cp - x2 * sp
    r2 = x1 * sp + x2 * cp
    rot = jnp.stack([r1, r2], axis=-1).reshape(x_rope.shape)
    if x_pass.shape[-1] > 0:
        return jnp.concatenate([rot, x_pass], axis=-1)
    return rot


if __name__ == "__main__":
    B, S, H = 2, 8, 32
    DIM = 16          # rotary dim; lanes [DIM:H] pass through unchanged
    BASE = 10000

    key = jax.random.PRNGKey(0)
    k1, k2, k3 = jax.random.split(key, 3)

    # 3-D path (batch, seq, hidden), seq_dim=1
    x = jax.random.normal(k1, (B, S, H), dtype=jnp.float32)
    out = jax.block_until_ready(rotary_embedding(x, DIM, base=BASE, seq_dim=1))
    ref = rope_reference(x, DIM, base=BASE)
    assert out.shape == x.shape and out.dtype == x.dtype
    assert jnp.allclose(out, ref, atol=1e-5, rtol=1e-5), "3-D mismatch vs reference"

    # 4-D path (batch, heads, seq, hidden), seq_dim=2
    NH = 2
    x4 = jax.random.normal(k2, (B, NH, S, H), dtype=jnp.float32)
    out4 = jax.block_until_ready(rotary_embedding(x4, DIM, base=BASE, seq_dim=2))
    ref4 = rope_reference(x4.reshape(B * NH, S, H), DIM, base=BASE).reshape(B, NH, S, H)
    assert out4.shape == x4.shape
    assert jnp.allclose(out4, ref4, atol=1e-5, rtol=1e-5), "4-D mismatch vs reference"

    # No pass-through tail (dim == hidden)
    xf = jax.random.normal(k3, (B, S, H), dtype=jnp.float32)
    outf = jax.block_until_ready(rotary_embedding(xf, H, base=BASE, seq_dim=1))
    reff = rope_reference(xf, H, base=BASE)
    assert jnp.allclose(outf, reff, atol=1e-5, rtol=1e-5), "full-rotary mismatch vs reference"

    print("KERNEL_OK")
</pallas_src>

<mosaic_0001>
module attributes {stable_mosaic.version = 11 : i64} {
  func.func @_rope_kernel(%arg0: i32, %arg1: i32, %arg2: memref<2x256xf32, #tpu.memory_space<vmem>>, %arg3: memref<1x256xf32, #tpu.memory_space<vmem>>, %arg4: memref<1x256xf32, #tpu.memory_space<vmem>>, %arg5: memref<1x256xf32, #tpu.memory_space<vmem>>, %arg6: memref<2x256xf32, #tpu.memory_space<vmem>>) attributes {dimension_semantics = [#tpu.dimension_semantics<parallel>, #tpu.dimension_semantics<parallel>], iteration_bounds = array<i64: 1, 1>, scalar_prefetch = 0 : i64, scratch_operands = 0 : i64, tpu.core_type = #tpu.core_type<tc>, window_params = [{transform_indices = @transform_0, window_bounds = array<i64: 2, 256>}, {transform_indices = @transform_1, window_bounds = array<i64: 1, 256>}, {transform_indices = @transform_2, window_bounds = array<i64: 1, 256>}, {transform_indices = @transform_3, window_bounds = array<i64: 1, 256>}, {transform_indices = @transform_4, window_bounds = array<i64: 2, 256>}]} {
    %c0 = arith.constant 0 : index
    %c0_0 = arith.constant 0 : index
    %0 = vector.load %arg2[%c0, %c0_0] : memref<2x256xf32, #tpu.memory_space<vmem>>, vector<2x256xf32>
    %c0_1 = arith.constant 0 : index
    %c0_2 = arith.constant 0 : index
    %1 = vector.load %arg3[%c0_1, %c0_2] : memref<1x256xf32, #tpu.memory_space<vmem>>, vector<1x256xf32>
    %2 = vector.extract_strided_slice %0 {offsets = [0, 1], sizes = [2, 255], strides = [1, 1]} : vector<2x256xf32> to vector<2x255xf32>
    %3 = vector.extract_strided_slice %0 {offsets = [0, 0], sizes = [2, 1], strides = [1, 1]} : vector<2x256xf32> to vector<2x1xf32>
    %4 = tpu.concatenate %2, %3 in 1 : vector<2x255xf32>, vector<2x1xf32> -> vector<2x256xf32>
    %5 = vector.extract_strided_slice %0 {offsets = [0, 255], sizes = [2, 1], strides = [1, 1]} : vector<2x256xf32> to vector<2x1xf32>
    %6 = vector.extract_strided_slice %0 {offsets = [0, 0], sizes = [2, 255], strides = [1, 1]} : vector<2x256xf32> to vector<2x255xf32>
    %7 = tpu.concatenate %5, %6 in 1 : vector<2x1xf32>, vector<2x255xf32> -> vector<2x256xf32>
    %8 = vector.broadcast %1 : vector<1x256xf32> to vector<2x256xf32>
    %9 = arith.mulf %0, %8 : vector<2x256xf32>
    %c0_3 = arith.constant 0 : index
    %c0_4 = arith.constant 0 : index
    %10 = vector.load %arg4[%c0_3, %c0_4] : memref<1x256xf32, #tpu.memory_space<vmem>>, vector<1x256xf32>
    %11 = vector.broadcast %10 : vector<1x256xf32> to vector<2x256xf32>
    %12 = arith.mulf %4, %11 : vector<2x256xf32>
    %13 = arith.addf %9, %12 : vector<2x256xf32>
    %c0_5 = arith.constant 0 : index
    %c0_6 = arith.constant 0 : index
    %14 = vector.load %arg5[%c0_5, %c0_6] : memref<1x256xf32, #tpu.memory_space<vmem>>, vector<1x256xf32>
    %15 = vector.broadcast %14 : vector<1x256xf32> to vector<2x256xf32>
    %16 = arith.mulf %7, %15 : vector<2x256xf32>
    %17 = arith.addf %13, %16 : vector<2x256xf32>
    %c0_7 = arith.constant 0 : index
    %c0_8 = arith.constant 0 : index
    %18 = vector.load %arg6[%c0_7, %c0_8] : memref<2x256xf32, #tpu.memory_space<vmem>>, vector<2x256xf32>
    tpu.vector_store %arg6[%c0_7, %c0_8], %17 {strides = array<i32>} : memref<2x256xf32, #tpu.memory_space<vmem>>, vector<2x256xf32>,
    return
  }
  func.func @transform_0(%arg0: i32, %arg1: i32) -> (i32, i32) {
    %c0_i32 = arith.constant 0 : i32
    return %arg1, %arg0 : i32, i32
  }
  func.func @transform_1(%arg0: i32, %arg1: i32) -> (i32, i32) {
    %c0_i32 = arith.constant 0 : i32
    %c0_i32_0 = arith.constant 0 : i32
    return %c0_i32, %arg0 : i32, i32
  }
  func.func @transform_2(%arg0: i32, %arg1: i32) -> (i32, i32) {
    %c0_i32 = arith.constant 0 : i32
    %c0_i32_0 = arith.constant 0 : i32
    return %c0_i32, %arg0 : i32, i32
  }
  func.func @transform_3(%arg0: i32, %arg1: i32) -> (i32, i32) {
    %c0_i32 = arith.constant 0 : i32
    %c0_i32_0 = arith.constant 0 : i32
    return %c0_i32, %arg0 : i32, i32
  }
  func.func @transform_4(%arg0: i32, %arg1: i32) -> (i32, i32) {
    %c0_i32 = arith.constant 0 : i32
    return %arg1, %arg0 : i32, i32
  }
}

</mosaic_0001>

<llo_original>
// kernel: tpu_custom_call.1
$region0: #{tpu_custom_call.1}
  #allocation0 [shape = 'u32[]', space=smem, size = 0x4, offset = 0x4, fixed_abs, tag = 'smem constant byte address 0x4 - core index']
  #allocation1 [shape = 'u32[144,128]{1,0:T(1,128)}', space=vmem, size = 0x12000, scoped, tag = 'internal scratch']
  %s0 = inlined_call_operand.hbm [shape: f32[2,256], index: 0, kind: input, shape index: {}]
  %s1 = inlined_call_operand.vmem [shape: f32[1,256], index: 1, kind: input, shape index: {}]
  %s2 = inlined_call_operand.vmem [shape: f32[1,256], index: 2, kind: input, shape index: {}]
  %s3 = inlined_call_operand.vmem [shape: f32[1,256], index: 3, kind: input, shape index: {}]
  %s4 = inlined_call_operand.hbm [shape: f32[2,256], index: 4, kind: output, shape index: {}]
  %s5 = sld [smem:[#allocation0]]
  $region30: #{tpu_custom_call.1} parent=0
    _
  %s7 = ssub.s32 1, %s5
  %s8 = scalar_select 0, %s7, %s5
  $region1: #{tpu_custom_call.1} parent=0
    #allocation2 [shape = 'u8[2048]{0}', space=vmem, size = 0x800, scoped, tag = 'input window, operand 0, single buffered']
    #allocation3 [shape = 's32[1]{0}', space=sflag, size = 0x4, scoped, tag = 'scoped memory for tpu_custom_call.1']
    #allocation4 [shape = 's32[1]{0}', space=sflag, size = 0x4, scoped, tag = 'scoped memory for tpu_custom_call.1']
    #allocation5 [shape = 'u8[2048]{0}', space=vmem, size = 0x800, scoped, tag = 'output window, operand 0, single buffered']
    %9 = vsyncpa [#allocation3], 0
    %10 = vsyncpa [#allocation4], 0
    // Predicated region
    $region2: #{tpu_custom_call.1} parent=1 // pred_check
      _
    $region3: #{tpu_custom_call.1} parent=1 // pred_check_branch
      %12 = sbr.rel (0) target = $region5
    $region4: #{tpu_custom_call.1} parent=1 // pred_region
      %s14 = ssub.s32 64, 64
      %15 = vsyncadd [#allocation3], %s14
      %s17 = sshll.u32 [#allocation2], 4
      %s18 = int_to_ptr.vmem [resolvable:$true] %s17
      %20 = dma.hbm_to_vmem [thread:$0]  %s0, 64, %s18, [#allocation3]
    $region5: #{tpu_custom_call.1} parent=1 // pred_fallthru
      _
    // Predicated region
    $region6: #{tpu_custom_call.1} parent=1 // pred_check
      _
    $region7: #{tpu_custom_call.1} parent=1 // pred_check_branch
      %22 = sbr.rel (0) target = $region9
    $region8: #{tpu_custom_call.1} parent=1 // pred_region
      _
    $region9: #{tpu_custom_call.1} parent=1 // pred_fallthru
      _
    // Predicated region
    $region10: #{tpu_custom_call.1} parent=1 // pred_check
      _
    $region11: #{tpu_custom_call.1} parent=1 // pred_check_branch
      %24 = sbr.rel (0) target = $region13
    $region12: #{tpu_custom_call.1} parent=1 // pred_region
      _
    $region13: #{tpu_custom_call.1} parent=1 // pred_fallthru
      _
    // Predicated region
    $region14: #{tpu_custom_call.1} parent=1 // pred_check
      _
    $region15: #{tpu_custom_call.1} parent=1 // pred_check_branch
      %26 = sbr.rel (0) target = $region17
    $region16: #{tpu_custom_call.1} parent=1 // pred_region
      _
    $region17: #{tpu_custom_call.1} parent=1 // pred_fallthru
      _
    // Predicated region
    $region18: #{tpu_custom_call.1} parent=1 // pred_check
      _
    $region19: #{tpu_custom_call.1} parent=1 // pred_check_branch
      %28 = sbr.rel (0) target = $region21
    $region20: #{tpu_custom_call.1} parent=1 // pred_region
      %29 = dma.done [#allocation3], 64
    $region21: #{tpu_custom_call.1} parent=1 // pred_fallthru
      _
    %v30 = vld [vmem:[#allocation2] sm:$0xf]
    %v31 = vld [vmem:[%s1] sm:$0x3]
    %v34 = vunpack.c.l.s4 1983009808
    %v35 = vunpack.c.0.s8 %v34
    %v36 = vlaneseq
    %v37 = vshrl.u32 %v36, 7
    %v38 = vsub.s32 %v35, %v37
    %v39 = vrot.slane %v30, %v38
    %v40 = vcombine.high %v39, %v39
    %41 = vrot.lane.b32.xlu0 %v39, 127
    %v42 = vpop.permute.xlu0 %41
    %43 = vrot.lane.b32.xlu0 %v40, 127
    %v44 = vpop.permute.xlu0 %43
    %vm45 = vcmask 1039360
    %v46 = vsel %vm45, %v42, %v44
    %v50 = vsel %vm45, %v44, %v42
    %51 = vrot.lane.b32.xlu0 %v40, 1
    %v52 = vpop.permute.xlu0 %51
    %54 = vrot.lane.b32.xlu0 %v39, 1
    %v55 = vpop.permute.xlu0 %54
    %vm56 = vcmask 7168
    %v57 = vsel %vm56, %v55, %v52
    %v60 = vsel %vm56, %v52, %v55
    %v62 = vlaneseq
    %v63 = vshrl.u32 %v62, 7
    %v64 = vsub.s32 0, %v63
    %v65 = vrot.slane %v31, %v64
    %v66 = vlaneseq
    %v67 = vshrl.u32 %v66, 7
    %v68 = vsub.s32 1, %v67
    %v69 = vrot.slane %v31, %v68
    %v70 = vcombine.low %v65, %v69
    %v72 = vunpack.c.l.s4 1983009808
    %v73 = vunpack.c.0.s8 %v72
    %v74 = vlaneseq
    %v75 = vshrl.u32 %v74, 7
    %v76 = vsub.s32 %v73, %v75
    %v77 = vrot.slane %v70, %v76
    %v79 = vmul.f32 %v30, %v77
    %v80 = vld [vmem:[%s2] sm:$0x3]
    %v82 = vlaneseq
    %v83 = vshrl.u32 %v82, 7
    %v84 = vsub.s32 0, %v83
    %v85 = vrot.slane %v80, %v84
    %v86 = vlaneseq
    %v87 = vshrl.u32 %v86, 7
    %v88 = vsub.s32 1, %v87
    %v89 = vrot.slane %v80, %v88
    %v92 = vmul.f32 %v46, %v85
    %v93 = vmul.f32 %v50, %v89
    %v96 = vcombine.low %v92, %v93
    %v98 = vunpack.c.l.s4 1983009808
    %v99 = vunpack.c.0.s8 %v98
    %v100 = vlaneseq
    %v101 = vshrl.u32 %v100, 7
    %v102 = vsub.s32 %v99, %v101
    %v103 = vrot.slane %v96, %v102
    %v105 = vadd.f32 %v79, %v103
    %v106 = vld [vmem:[%s3] sm:$0x3]
    %v108 = vlaneseq
    %v109 = vshrl.u32 %v108, 7
    %v110 = vsub.s32 0, %v109
    %v111 = vrot.slane %v106, %v110
    %v112 = vlaneseq
    %v113 = vshrl.u32 %v112, 7
    %v114 = vsub.s32 1, %v113
    %v115 = vrot.slane %v106, %v114
    %v118 = vmul.f32 %v60, %v111
    %v119 = vmul.f32 %v57, %v115
    %v122 = vcombine.low %v118, %v119
    %v124 = vunpack.c.l.s4 1983009808
    %v125 = vunpack.c.0.s8 %v124
    %v126 = vlaneseq
    %v127 = vshrl.u32 %v126, 7
    %v128 = vsub.s32 %v125, %v127
    %v129 = vrot.slane %v122, %v128
    %v131 = vadd.f32 %v105, %v129
    %132 = vst [vmem:[#allocation5] sm:$0xf] %v131
    // Predicated region
    $region22: #{tpu_custom_call.1} parent=1 // pred_check
      _
    $region23: #{tpu_custom_call.1} parent=1 // pred_check_branch
      %134 = sbr.rel (0) target = $region25
    $region24: #{tpu_custom_call.1} parent=1 // pred_region
      %s136 = ssub.s32 64, 64
      %137 = vsyncadd [#allocation4], %s136
      %s139 = sshll.u32 [#allocation5], 4
      %s140 = int_to_ptr.vmem [resolvable:$true] %s139
      %142 = dma.vmem_to_hbm [thread:$0]  %s140, 64, %s4, [#allocation4]
    $region25: #{tpu_custom_call.1} parent=1 // pred_fallthru
      _
    // Predicated region
    $region26: #{tpu_custom_call.1} parent=1 // pred_check
      _
    $region27: #{tpu_custom_call.1} parent=1 // pred_check_branch
      %144 = sbr.rel (0) target = $region29
    $region28: #{tpu_custom_call.1} parent=1 // pred_region
      %145 = dma.done [#allocation4], 64
    $region29: #{tpu_custom_call.1} parent=1 // pred_fallthru
      _
    %146 = vsyncpa [#allocation3], 1
    %147 = vsyncpa [#allocation4], 1

</llo_original>
